<compile_context>
chip_gen: v7x
topology: tpu7x:2x2x1
jax: 0.10.0
libtpu: 0.0.40
codegen_flags: <defaults>
</compile_context>

<pallas_src>
import jax
import jax.numpy as jnp
from jax.experimental import pallas as pl
from jax.experimental.pallas import tpu as pltpu


def _identity_copy_kernel(x_ref, o_ref):
    # Pure identity: copy the lane-dense tile through VMEM unchanged.
    o_ref[...] = x_ref[...]


def _pick_row_tile(rows: int, dtype) -> int:
    """Largest row tile that (a) is legal ((8,128)-divisible or full-dim) and
    (b) keeps a double-buffered in+out pair well under ~8 MiB per block, so it
    fits the v5e 16 MiB / v7x 32 MiB default scoped VMEM limits."""
    bytes_per_row = 128 * jnp.dtype(dtype).itemsize
    max_rows_by_vmem = max(8, (8 * 1024 * 1024) // bytes_per_row)  # <= ~8 MiB/block
    if rows <= max_rows_by_vmem:
        # Full-extent block is always legal regardless of (8,128) divisibility.
        return rows
    # Otherwise pick the largest multiple-of-8 divisor of rows under the cap;
    # fall back to the full extent if none exists (still legal, just big).
    cap = int(max_rows_by_vmem) - (int(max_rows_by_vmem) % 8)
    for cand in range(cap, 7, -8):
        if rows % cand == 0:
            return cand
    return rows


def _identity_pass(x):
    """Single lane-dense identity pass through a Pallas kernel."""
    orig_shape = x.shape
    total = x.size

    if total % 128 == 0:
        rows = total // 128
        x2 = x.reshape(rows, 128)
        tile = _pick_row_tile(rows, x.dtype)
        grid = (rows // tile,)
        out = pl.pallas_call(
            _identity_copy_kernel,
            out_shape=jax.ShapeDtypeStruct((rows, 128), x.dtype),
            grid_spec=pltpu.PrefetchScalarGridSpec(
                num_scalar_prefetch=0,
                grid=grid,
                in_specs=[pl.BlockSpec((tile, 128), lambda i: (i, 0))],
                out_specs=pl.BlockSpec((tile, 128), lambda i: (i, 0)),
            ),
            compiler_params=pltpu.CompilerParams(
                # Independent row tiles -> parallel (sharded across TCs on v7x).
                dimension_semantics=("parallel",),
            ),
            # Output aliases the input buffer: no extra HBM allocation for an
            # unchanged tensor.
            input_output_aliases={0: 0},
        )(x2)
        return out.reshape(orig_shape)

    # Fallback (total not a multiple of 128): whole-array block, single step.
    # block_shape equal to the full array dims is always legal.
    out = pl.pallas_call(
        _identity_copy_kernel,
        out_shape=jax.ShapeDtypeStruct(orig_shape, x.dtype),
        grid_spec=pltpu.PrefetchScalarGridSpec(
            num_scalar_prefetch=0,
            grid=(1,),
            in_specs=[pl.BlockSpec(orig_shape, lambda i: (0,) * len(orig_shape))],
            out_specs=pl.BlockSpec(orig_shape, lambda i: (0,) * len(orig_shape)),
        ),
        compiler_params=pltpu.CompilerParams(
            dimension_semantics=("arbitrary",),
        ),
        input_output_aliases={0: 0},
    )(x)
    return out


class Transformer:
    """JAX/Pallas mirror of the (empty) PyTorch Transformer module."""

    def __init__(self, num_layer: int):
        self.num_layer = int(num_layer)
        # Reference __init__ creates no parameters; nothing to initialize.

    def forward(self, x=None):
        # Exact reference semantics: forward() with no args returns None.
        if x is None:
            return None
        # Runnable kernel path: a single identity pass (the reference layer
        # body is `pass`, so stacking num_layer empty layers == one identity).
        return _identity_pass(x)

    __call__ = forward


if __name__ == "__main__":
    key = jax.random.PRNGKey(0)
    batch, seq, hidden = 2, 8, 32
    x = jax.random.normal(key, (batch, seq, hidden), dtype=jnp.float32)

    model = Transformer(num_layer=3)

    # Exact reference behavior: forward() -> None
    assert model.forward() is None

    # Kernel execution path (lane-dense single-pass identity).
    y = model(x)
    y = jax.block_until_ready(y)

    assert y.shape == x.shape and y.dtype == x.dtype
    assert bool(jnp.allclose(y, x))

    print("KERNEL_OK")
</pallas_src>

<mosaic_0001>
module attributes {stable_mosaic.version = 11 : i64} {
  func.func @_identity_copy_kernel(%arg0: i32, %arg1: memref<4x128xf32, #tpu.memory_space<vmem>>, %arg2: memref<4x128xf32, #tpu.memory_space<vmem>>) attributes {dimension_semantics = [#tpu.dimension_semantics<parallel>], iteration_bounds = array<i64: 1>, scalar_prefetch = 0 : i64, scratch_operands = 0 : i64, tpu.core_type = #tpu.core_type<tc>, window_params = [{transform_indices = @transform_0, window_bounds = array<i64: 4, 128>}, {transform_indices = @transform_1, window_bounds = array<i64: 4, 128>}]} {
    %c0 = arith.constant 0 : index
    %c0_0 = arith.constant 0 : index
    %0 = vector.load %arg1[%c0, %c0_0] : memref<4x128xf32, #tpu.memory_space<vmem>>, vector<4x128xf32>
    %c0_1 = arith.constant 0 : index
    %c0_2 = arith.constant 0 : index
    %1 = vector.load %arg2[%c0_1, %c0_2] : memref<4x128xf32, #tpu.memory_space<vmem>>, vector<4x128xf32>
    tpu.vector_store %arg2[%c0_1, %c0_2], %0 {strides = array<i32>} : memref<4x128xf32, #tpu.memory_space<vmem>>, vector<4x128xf32>,
    return
  }
  func.func @transform_0(%arg0: i32) -> (i32, i32) {
    %c0_i32 = arith.constant 0 : i32
    %c0_i32_0 = arith.constant 0 : i32
    return %arg0, %c0_i32 : i32, i32
  }
  func.func @transform_1(%arg0: i32) -> (i32, i32) {
    %c0_i32 = arith.constant 0 : i32
    %c0_i32_0 = arith.constant 0 : i32
    return %arg0, %c0_i32 : i32, i32
  }
}

</mosaic_0001>

<llo_original>
// kernel: tpu_custom_call.1
$region0: #{tpu_custom_call.1}
  #allocation0 [shape = 'u32[]', space=smem, size = 0x4, offset = 0x4, fixed_abs, tag = 'smem constant byte address 0x4 - core index']
  #allocation1 [shape = 'u32[144,128]{1,0:T(1,128)}', space=vmem, size = 0x12000, scoped, tag = 'internal scratch']
  %s0 = inlined_call_operand.hbm [shape: f32[4,128], index: 0, kind: input, shape index: {}, may-alias: {0,1}]
  %s1 = inlined_call_operand.hbm [shape: f32[4,128], index: 1, kind: output, shape index: {}, may-alias: {0,1}]
  %s2 = sld [smem:[#allocation0]]
  $region18: #{tpu_custom_call.1} parent=0
    _
  %s4 = ssub.s32 1, %s2
  %s5 = scalar_select 0, %s4, %s2
  $region1: #{tpu_custom_call.1} parent=0
    #allocation2 [shape = 'u8[2048]{0}', space=vmem, size = 0x800, scoped, tag = 'input window, operand 0, single buffered']
    #allocation3 [shape = 's32[1]{0}', space=sflag, size = 0x4, scoped, tag = 'scoped memory for tpu_custom_call.1']
    #allocation4 [shape = 's32[1]{0}', space=sflag, size = 0x4, scoped, tag = 'scoped memory for tpu_custom_call.1']
    #allocation5 [shape = 'u8[2048]{0}', space=vmem, size = 0x800, scoped, tag = 'output window, operand 0, single buffered']
    %6 = vsyncpa [#allocation3], 0
    %7 = vsyncpa [#allocation4], 0
    // Predicated region
    $region2: #{tpu_custom_call.1} parent=1 // pred_check
      _
    $region3: #{tpu_custom_call.1} parent=1 // pred_check_branch
      %9 = sbr.rel (0) target = $region5
    $region4: #{tpu_custom_call.1} parent=1 // pred_region
      %s11 = ssub.s32 64, 64
      %12 = vsyncadd [#allocation3], %s11
      %s14 = sshll.u32 [#allocation2], 4
      %s15 = int_to_ptr.vmem [resolvable:$true] %s14
      %17 = dma.hbm_to_vmem [thread:$0]  %s0, 64, %s15, [#allocation3]
    $region5: #{tpu_custom_call.1} parent=1 // pred_fallthru
      _
    // Predicated region
    $region6: #{tpu_custom_call.1} parent=1 // pred_check
      _
    $region7: #{tpu_custom_call.1} parent=1 // pred_check_branch
      %19 = sbr.rel (0) target = $region9
    $region8: #{tpu_custom_call.1} parent=1 // pred_region
      %20 = dma.done [#allocation3], 64
    $region9: #{tpu_custom_call.1} parent=1 // pred_fallthru
      _
    %v21 = vld [vmem:[#allocation2] sm:$0xf]
    %22 = vst [vmem:[#allocation5] sm:$0xf] %v21
    // Predicated region
    $region10: #{tpu_custom_call.1} parent=1 // pred_check
      _
    $region11: #{tpu_custom_call.1} parent=1 // pred_check_branch
      %24 = sbr.rel (0) target = $region13
    $region12: #{tpu_custom_call.1} parent=1 // pred_region
      %s26 = ssub.s32 64, 64
      %27 = vsyncadd [#allocation4], %s26
      %s29 = sshll.u32 [#allocation5], 4
      %s30 = int_to_ptr.vmem [resolvable:$true] %s29
      %32 = dma.vmem_to_hbm [thread:$0]  %s30, 64, %s1, [#allocation4]
    $region13: #{tpu_custom_call.1} parent=1 // pred_fallthru
      _
    // Predicated region
    $region14: #{tpu_custom_call.1} parent=1 // pred_check
      _
    $region15: #{tpu_custom_call.1} parent=1 // pred_check_branch
      %34 = sbr.rel (0) target = $region17
    $region16: #{tpu_custom_call.1} parent=1 // pred_region
      %35 = dma.done [#allocation4], 64
    $region17: #{tpu_custom_call.1} parent=1 // pred_fallthru
      _
    %36 = vsyncpa [#allocation3], 1
    %37 = vsyncpa [#allocation4], 1

</llo_original>
